<compile_context>
chip_gen: v5e
topology: v5e:2x2
jax: 0.10.0
libtpu: 0.0.40
codegen_flags: <defaults>
</compile_context>

<pallas_src>
import functools

import jax
import jax.numpy as jnp
from jax.experimental import pallas as pl
from jax.experimental.pallas import tpu as pltpu


_EPS_BLOCK_BUDGET_BYTES = 4 * 1024 * 1024   # per-buffer streamed weight_eps block


def _round_up(v, m):
    return -(-v // m) * m


def _pad_to(a, shape):
    pads = [(0, t - s) for s, t in zip(a.shape, shape)]
    if any(p[1] for p in pads):
        a = jnp.pad(a, pads)
    return a


def _pick_tile(dim, max_tile, unit=128):
    """128-aligned tile <= max_tile minimizing zero padding of `dim` (ties -> larger
    tile, i.e. fewer grid steps)."""
    max_tile = max(max_tile, unit)
    best_pad, best_t = None, unit
    t = unit
    while t <= max_tile:
        pad = _round_up(dim, t) - dim
        if best_pad is None or pad < best_pad or (pad == best_pad and t > best_t):
            best_pad, best_t = pad, t
        t += unit
    return best_t


def _choose_tiles(pop, din, dout, eps_itemsize=2):
    """Pick (tp, tk, tn) block sizes and padded dims for one NESLinear layer.

    Preference order:
      1. Full-extent Din / Dout blocks (zero padding of the dominant weight_eps
         HBM stream) whenever >=8 population rows fit the per-buffer VMEM budget.
      2. Split the population axis (only 8-row alignment needed, no reduction) to
         get >=2 grid steps for DMA/compute pipelining and megacore sharding.
      3. Only for large layers, tile Din (reduction, innermost grid axis) and then
         Dout at 128-aligned sizes chosen to minimize padding traffic.
    """
    budget = _EPS_BLOCK_BUDGET_BYTES // eps_itemsize   # elements per eps block

    def rows_fit(tk, tn):
        return budget // (tk * tn)

    # Din (sublane / reduction axis): pad to a multiple of 8 so the in-kernel chunk
    # loop is always aligned (extra eps traffic <= 7/din, negligible).
    din_p = _round_up(din, 8)
    tk = din_p
    dout_p, tn = dout, dout

    if (din_p > 1024 or rows_fit(tk, tn) < 8) and din_p > 128:
        max_tk = min(512, max(128, (budget // (8 * max(tn, 128))) // 128 * 128))
        tk = _pick_tile(din, max_tk)
        din_p = _round_up(din, tk)

    if (dout > 1024 or rows_fit(tk, tn) < 8) and dout > 128:
        max_tn = min(512, max(128, (budget // (8 * tk)) // 128 * 128))
        tn = _pick_tile(dout, max_tn)
        dout_p = _round_up(dout, tn)

    # Population axis.
    tp_fit = min(64, max(8, rows_fit(tk, tn)))
    pop_p8 = _round_up(pop, 8)
    small_pad = (pop_p8 - pop) * 8 <= pop          # <= 12.5% extra eps traffic
    if pop > tp_fit or (pop >= 16 and small_pad):
        pop_p = pop_p8
        # Largest multiple of 8 dividing the padded population, capped so we get at
        # least two grid steps (pipelining + megacore) and stay within the budget.
        cap = max(8, min(tp_fit // 8 * 8, (pop_p // 2) // 8 * 8))
        tp = 8
        for t in range(cap, 7, -8):
            if pop_p % t == 0:
                tp = t
                break
    else:
        tp, pop_p = pop, pop

    return (tp, tk, tn), (pop_p, din_p, dout_p)


def _nes_linear_kernel(x_ref, w_ref, b_ref, weps_ref, beps_ref, o_ref, acc_ref,
                       *, activation, k_chunk=8):
    k = pl.program_id(2)

    @pl.when(k == 0)
    def _init():
        acc_ref[...] = jnp.zeros_like(acc_ref)

    x = x_ref[...].astype(jnp.float32)            # (TP, TK)
    w = w_ref[...].astype(jnp.float32)            # (TK, TN)

    # Shared-weight contribution on the MXU, f32 accumulate.
    acc = jnp.dot(x, w, preferred_element_type=jnp.float32)   # (TP, TN)

    # Per-member perturbation: sum_i x[p, i] * W_eps[p, i, o], accumulated over
    # 8-sublane chunks of the Din block so the 3-D broadcast intermediate stays one
    # (TP, 8, TN) slab (never an eps-block-sized f32 temporary).  Din is padded to a
    # multiple of 8, so every chunk slice is sublane-aligned.
    tk = x_ref.shape[1]
    pert = jnp.zeros_like(acc)
    for s in range(0, tk, k_chunk):               # static trip count
        c = min(k_chunk, tk - s)
        xc = x[:, s:s + c]                                        # (TP, c)
        # Explicit f32 upcast of the bf16 eps chunk (v5e VPU has no bf16 ALUs).
        ec = weps_ref[:, s:s + c, :].astype(jnp.float32)          # (TP, c, TN)
        pert = pert + jnp.sum(xc[:, :, None] * ec, axis=1)        # XLU sublane reduce

    acc_ref[...] += acc + pert

    @pl.when(k == pl.num_programs(2) - 1)
    def _finalize():
        out = (acc_ref[...]
               + b_ref[...].astype(jnp.float32)
               + beps_ref[...].astype(jnp.float32))
        if activation == "relu":
            out = jnp.maximum(out, 0.0)
        elif activation == "tanh":
            out = jnp.tanh(out)
        o_ref[...] = out.astype(o_ref.dtype)


def _nes_linear_padded(xp, wp, bp, wep, bep, tiles, activation):
    """pallas_call on pre-padded operands; shapes must be multiples of `tiles`."""
    tp, tk, tn = tiles
    pop_p, din_p = xp.shape
    dout_p = wp.shape[1]
    grid = (pop_p // tp, dout_p // tn, din_p // tk)   # reduction (Din) axis last

    kernel = functools.partial(_nes_linear_kernel, activation=activation)

    eps_bytes = wep.size * wep.dtype.itemsize
    cost = pl.CostEstimate(
        flops=4 * pop_p * din_p * dout_p,             # shared matmul + perturbation
        transcendentals=pop_p * dout_p if activation == "tanh" else 0,
        bytes_accessed=(xp.size * 4 + wp.size * 4 + bp.size * 4
                        + eps_bytes + bep.size * 4 + pop_p * dout_p * 4),
    )

    return pl.pallas_call(
        kernel,
        out_shape=jax.ShapeDtypeStruct((pop_p, dout_p), jnp.float32),
        grid_spec=pltpu.PrefetchScalarGridSpec(
            num_scalar_prefetch=0,
            grid=grid,
            in_specs=[
                pl.BlockSpec((tp, tk), lambda p, n, k: (p, k)),         # x
                pl.BlockSpec((tk, tn), lambda p, n, k: (k, n)),         # W
                pl.BlockSpec((1, tn), lambda p, n, k: (0, n)),          # bias
                pl.BlockSpec((tp, tk, tn), lambda p, n, k: (p, k, n)),  # weight_eps (bf16 stream)
                pl.BlockSpec((tp, tn), lambda p, n, k: (p, n)),         # bias_eps
            ],
            out_specs=pl.BlockSpec((tp, tn), lambda p, n, k: (p, n)),
            scratch_shapes=[pltpu.VMEM((tp, tn), jnp.float32)],         # f32 accumulator
        ),
        compiler_params=pltpu.CompilerParams(
            dimension_semantics=("parallel", "parallel", "arbitrary"),
            vmem_limit_bytes=32 * 1024 * 1024,
        ),
        cost_estimate=cost,
    )(xp, wp, bp, wep, bep)


def nes_linear_pallas(x, w, b, weight_eps, bias_eps, activation):
    """One NESLinear layer (training mode); pads operands and dispatches the kernel."""
    pop, din = x.shape
    dout = w.shape[1]
    assert w.shape == (din, dout)
    assert weight_eps.shape == (pop, din, dout)
    assert bias_eps.shape == (pop, dout)
    tiles, (pop_p, din_p, dout_p) = _choose_tiles(pop, din, dout,
                                                  weight_eps.dtype.itemsize)
    out = _nes_linear_padded(
        _pad_to(x, (pop_p, din_p)),
        _pad_to(w, (din_p, dout_p)),
        _pad_to(b.reshape(1, dout), (1, dout_p)),
        _pad_to(weight_eps, (pop_p, din_p, dout_p)),
        _pad_to(bias_eps, (pop_p, dout_p)),
        tiles, activation)
    return out[:pop, :dout]


class NESPolicyPallas:
    """JAX/Pallas re-implementation of NESPolicy's forward pass (training mode)."""

    def __init__(self, population_size, input_dim, hidden_dims, output_dim, key):
        self.population_size = population_size
        dims = [input_dim, *hidden_dims, output_dim]
        self.layers = []
        n = len(dims) - 1
        for i in range(n):
            din, dout = dims[i], dims[i + 1]
            key, kw, kb, kwe, kbe = jax.random.split(key, 5)
            scale = 1.0 / (din ** 0.5)   # keep activations O(1) so the check is meaningful
            weight = (scale * jax.random.normal(kw, (din, dout))).astype(jnp.float32)
            bias = (0.1 * jax.random.normal(kb, (dout,))).astype(jnp.float32)
            # weight_eps stored/streamed in bf16 (the dominant HBM traffic).
            weight_eps = (0.1 * scale * jax.random.normal(
                kwe, (population_size, din, dout))).astype(jnp.bfloat16)
            bias_eps = (0.01 * jax.random.normal(
                kbe, (population_size, dout))).astype(jnp.float32)

            tiles, padded = _choose_tiles(population_size, din, dout,
                                          weight_eps.dtype.itemsize)
            pop_p, din_p, dout_p = padded
            self.layers.append(dict(
                din=din, dout=dout, tiles=tiles, padded=padded,
                activation="tanh" if i == n - 1 else "relu",
                # Pad parameters ONCE here so the forward never copies the
                # (P, Din, Dout) eps tensor just to realign it.
                weight=_pad_to(weight, (din_p, dout_p)),
                bias=_pad_to(bias.reshape(1, dout), (1, dout_p)),
                weight_eps=_pad_to(weight_eps, (pop_p, din_p, dout_p)),
                bias_eps=_pad_to(bias_eps, (pop_p, dout_p)),
            ))

    def __call__(self, x, training=True):
        if training:
            assert x.shape[0] == self.population_size
            # TODO(synk): fuse all layers into one pallas_call (activations resident in
            # VMEM scratch, per-layer eps streamed) to remove per-layer launch overhead.
            for layer in self.layers:
                pop_p, din_p, _ = layer["padded"]
                xp = _pad_to(x, (pop_p, din_p))
                out = _nes_linear_padded(xp, layer["weight"], layer["bias"],
                                         layer["weight_eps"], layer["bias_eps"],
                                         layer["tiles"], layer["activation"])
                x = out[:self.population_size, :layer["dout"]]
            return x
        # Eval path (shared weights only): negligible compute, plain JAX glue.
        for layer in self.layers:
            w = layer["weight"][:layer["din"], :layer["dout"]]
            b = layer["bias"][0, :layer["dout"]]
            x = x @ w + b
            x = jnp.tanh(x) if layer["activation"] == "tanh" else jnp.maximum(x, 0.0)
        return x

    def reference(self, x):
        """Pure-JAX reference matching the PyTorch training forward."""
        pop = self.population_size
        for layer in self.layers:
            din, dout = layer["din"], layer["dout"]
            w = (layer["weight"][:din, :dout][None, :, :]
                 + layer["weight_eps"][:pop, :din, :dout].astype(jnp.float32))
            b = layer["bias"][0, :dout][None, :] + layer["bias_eps"][:pop, :dout]
            x = jnp.einsum("pi,pio->po", x, w,
                           precision=jax.lax.Precision.HIGHEST) + b
            x = jnp.tanh(x) if layer["activation"] == "tanh" else jnp.maximum(x, 0.0)
        return x


if __name__ == "__main__":
    def run_check(population_size, input_dim, hidden_dims, output_dim, tol=2e-3):
        key = jax.random.PRNGKey(0)
        key, kx = jax.random.split(key)
        policy = NESPolicyPallas(population_size, input_dim, hidden_dims, output_dim, key)
        x = jax.random.normal(kx, (population_size, input_dim), jnp.float32)

        out = jax.block_until_ready(policy(x, training=True))
        ref = policy.reference(x)

        assert out.shape == (population_size, output_dim)
        err = float(jnp.max(jnp.abs(out - ref)))
        assert jnp.allclose(out, ref, atol=tol, rtol=tol), f"mismatch vs reference: {err}"

    # Tiny config: every dim a single full-extent block (grid (1,1,1) per layer).
    run_check(population_size=8, input_dim=16, hidden_dims=[32, 32], output_dim=4)
    # Unaligned dims: full-extent Din/Dout blocks (no 128-padding of the eps stream)
    # with a 2-step population grid axis for pipelining / megacore.
    run_check(population_size=48, input_dim=300, hidden_dims=[160], output_dim=132)
    # Large reduction dim: Din tiled at 256 (5 accumulator steps exercising the
    # k==0 init and last-k finalize paths) plus a 2-step population axis.
    run_check(population_size=16, input_dim=1280, hidden_dims=[256], output_dim=8)

    print("KERNEL_OK")
</pallas_src>

<mosaic_0001>
module attributes {stable_mosaic.version = 11 : i64} {
  func.func @_nes_linear_kernel(%arg0: i32, %arg1: i32, %arg2: i32, %arg3: memref<8x16xf32, #tpu.memory_space<vmem>>, %arg4: memref<16x32xf32, #tpu.memory_space<vmem>>, %arg5: memref<1x32xf32, #tpu.memory_space<vmem>>, %arg6: memref<8x16x32xbf16, #tpu.memory_space<vmem>>, %arg7: memref<8x32xf32, #tpu.memory_space<vmem>>, %arg8: memref<8x32xf32, #tpu.memory_space<vmem>>, %arg9: memref<8x32xf32, #tpu.memory_space<vmem>>) attributes {dimension_semantics = [#tpu.dimension_semantics<parallel>, #tpu.dimension_semantics<parallel>, #tpu.dimension_semantics<arbitrary>], iteration_bounds = array<i64: 1, 1, 1>, scalar_prefetch = 0 : i64, scratch_operands = 1 : i64, tpu.core_type = #tpu.core_type<tc>, window_params = [{transform_indices = @transform_0, window_bounds = array<i64: 8, 16>}, {transform_indices = @transform_1, window_bounds = array<i64: 16, 32>}, {transform_indices = @transform_2, window_bounds = array<i64: 1, 32>}, {transform_indices = @transform_3, window_bounds = array<i64: 8, 16, 32>}, {transform_indices = @transform_4, window_bounds = array<i64: 8, 32>}, {transform_indices = @transform_5, window_bounds = array<i64: 8, 32>}]} {
    %c0_i32 = arith.constant 0 : i32
    %0 = arith.cmpi eq, %arg2, %c0_i32 : i32
    %1 = arith.extui %0 : i1 to i32
    %c0_i32_0 = arith.constant 0 : i32
    %2 = arith.cmpi ne, %1, %c0_i32_0 : i32
    scf.if %2 {
      %cst_18 = arith.constant 0.000000e+00 : f32
      %30 = vector.broadcast %cst_18 : f32 to vector<8x32xf32>
      %c0_19 = arith.constant 0 : index
      %c0_20 = arith.constant 0 : index
      %31 = vector.load %arg9[%c0_19, %c0_20] : memref<8x32xf32, #tpu.memory_space<vmem>>, vector<8x32xf32>
      tpu.vector_store %arg9[%c0_19, %c0_20], %30 {strides = array<i32>} : memref<8x32xf32, #tpu.memory_space<vmem>>, vector<8x32xf32>,
    } else {
    }
    %c0 = arith.constant 0 : index
    %c0_1 = arith.constant 0 : index
    %3 = vector.load %arg3[%c0, %c0_1] : memref<8x16xf32, #tpu.memory_space<vmem>>, vector<8x16xf32>
    %c0_2 = arith.constant 0 : index
    %c0_3 = arith.constant 0 : index
    %4 = vector.load %arg4[%c0_2, %c0_3] : memref<16x32xf32, #tpu.memory_space<vmem>>, vector<16x32xf32>
    %cst = arith.constant dense<0.000000e+00> : vector<8x32xf32>
    %5 = tpu.matmul %3, %4, %cst {dimension_numbers = #tpu.dot_dimension_numbers<[1], [0], [0], [1], [0, 0, 1, 1], [], []>} : vector<8x16xf32>, vector<16x32xf32>, vector<8x32xf32> -> vector<8x32xf32>
    %cst_4 = arith.constant 0.000000e+00 : f32
    %6 = vector.broadcast %cst_4 : f32 to vector<8x32xf32>
    %7 = vector.extract_strided_slice %3 {offsets = [0, 0], sizes = [8, 8], strides = [1, 1]} : vector<8x16xf32> to vector<8x8xf32>
    %c0_5 = arith.constant 0 : index
    %c0_6 = arith.constant 0 : index
    %c0_7 = arith.constant 0 : index
    %8 = vector.load %arg6[%c0_5, %c0_6, %c0_7] : memref<8x16x32xbf16, #tpu.memory_space<vmem>>, vector<8x8x32xbf16>
    %9 = arith.extf %8 : vector<8x8x32xbf16> to vector<8x8x32xf32>
    %10 = vector.shape_cast %7 : vector<8x8xf32> to vector<8x8x1xf32>
    %11 = vector.broadcast %10 : vector<8x8x1xf32> to vector<8x8x32xf32>
    %12 = arith.mulf %11, %9 : vector<8x8x32xf32>
    %cst_8 = arith.constant dense<0.000000e+00> : vector<8x32xf32>
    %13 = vector.multi_reduction <add>, %12, %cst_8 [1] : vector<8x8x32xf32> to vector<8x32xf32>
    %14 = arith.addf %6, %13 : vector<8x32xf32>
    %15 = vector.extract_strided_slice %3 {offsets = [0, 8], sizes = [8, 8], strides = [1, 1]} : vector<8x16xf32> to vector<8x8xf32>
    %c0_9 = arith.constant 0 : index
    %c8 = arith.constant 8 : index
    %c0_10 = arith.constant 0 : index
    %16 = vector.load %arg6[%c0_9, %c8, %c0_10] : memref<8x16x32xbf16, #tpu.memory_space<vmem>>, vector<8x8x32xbf16>
    %17 = arith.extf %16 : vector<8x8x32xbf16> to vector<8x8x32xf32>
    %18 = vector.shape_cast %15 : vector<8x8xf32> to vector<8x8x1xf32>
    %19 = vector.broadcast %18 : vector<8x8x1xf32> to vector<8x8x32xf32>
    %20 = arith.mulf %19, %17 : vector<8x8x32xf32>
    %cst_11 = arith.constant dense<0.000000e+00> : vector<8x32xf32>
    %21 = vector.multi_reduction <add>, %20, %cst_11 [1] : vector<8x8x32xf32> to vector<8x32xf32>
    %22 = arith.addf %14, %21 : vector<8x32xf32>
    %c0_12 = arith.constant 0 : index
    %c0_13 = arith.constant 0 : index
    %23 = vector.load %arg9[%c0_12, %c0_13] : memref<8x32xf32, #tpu.memory_space<vmem>>, vector<8x32xf32>
    %24 = arith.addf %5, %22 : vector<8x32xf32>
    %25 = arith.addf %23, %24 : vector<8x32xf32>
    %c0_14 = arith.constant 0 : index
    %c0_15 = arith.constant 0 : index
    %26 = vector.load %arg9[%c0_14, %c0_15] : memref<8x32xf32, #tpu.memory_space<vmem>>, vector<8x32xf32>
    tpu.vector_store %arg9[%c0_14, %c0_15], %25 {strides = array<i32>} : memref<8x32xf32, #tpu.memory_space<vmem>>, vector<8x32xf32>,
    %c0_i32_16 = arith.constant 0 : i32
    %27 = arith.cmpi eq, %arg2, %c0_i32_16 : i32
    %28 = arith.extui %27 : i1 to i32
    %c0_i32_17 = arith.constant 0 : i32
    %29 = arith.cmpi ne, %28, %c0_i32_17 : i32
    scf.if %29 {
      %c0_18 = arith.constant 0 : index
      %c0_19 = arith.constant 0 : index
      %30 = vector.load %arg9[%c0_18, %c0_19] : memref<8x32xf32, #tpu.memory_space<vmem>>, vector<8x32xf32>
      %c0_20 = arith.constant 0 : index
      %c0_21 = arith.constant 0 : index
      %31 = vector.load %arg5[%c0_20, %c0_21] : memref<1x32xf32, #tpu.memory_space<vmem>>, vector<1x32xf32>
      %32 = vector.broadcast %31 : vector<1x32xf32> to vector<8x32xf32>
      %33 = arith.addf %30, %32 : vector<8x32xf32>
      %c0_22 = arith.constant 0 : index
      %c0_23 = arith.constant 0 : index
      %34 = vector.load %arg7[%c0_22, %c0_23] : memref<8x32xf32, #tpu.memory_space<vmem>>, vector<8x32xf32>
      %35 = arith.addf %33, %34 : vector<8x32xf32>
      %cst_24 = arith.constant 0.000000e+00 : f32
      %36 = vector.broadcast %cst_24 : f32 to vector<8x32xf32>
      %37 = arith.maximumf %35, %36 : vector<8x32xf32>
      %c0_25 = arith.constant 0 : index
      %c0_26 = arith.constant 0 : index
      %38 = vector.load %arg8[%c0_25, %c0_26] : memref<8x32xf32, #tpu.memory_space<vmem>>, vector<8x32xf32>
      tpu.vector_store %arg8[%c0_25, %c0_26], %37 {strides = array<i32>} : memref<8x32xf32, #tpu.memory_space<vmem>>, vector<8x32xf32>,
    } else {
    }
    return
  }
  func.func @transform_0(%arg0: i32, %arg1: i32, %arg2: i32) -> (i32, i32) {
    %c0_i32 = arith.constant 0 : i32
    return %arg0, %arg2 : i32, i32
  }
  func.func @transform_1(%arg0: i32, %arg1: i32, %arg2: i32) -> (i32, i32) {
    %c0_i32 = arith.constant 0 : i32
    return %arg2, %arg1 : i32, i32
  }
  func.func @transform_2(%arg0: i32, %arg1: i32, %arg2: i32) -> (i32, i32) {
    %c0_i32 = arith.constant 0 : i32
    %c0_i32_0 = arith.constant 0 : i32
    return %c0_i32, %arg1 : i32, i32
  }
  func.func @transform_3(%arg0: i32, %arg1: i32, %arg2: i32) -> (i32, i32, i32) {
    %c0_i32 = arith.constant 0 : i32
    return %arg0, %arg2, %arg1 : i32, i32, i32
  }
  func.func @transform_4(%arg0: i32, %arg1: i32, %arg2: i32) -> (i32, i32) {
    %c0_i32 = arith.constant 0 : i32
    return %arg0, %arg1 : i32, i32
  }
  func.func @transform_5(%arg0: i32, %arg1: i32, %arg2: i32) -> (i32, i32) {
    %c0_i32 = arith.constant 0 : i32
    return %arg0, %arg1 : i32, i32
  }
}

</mosaic_0001>

<llo_original>
// kernel: tpu_custom_call.1
$region0: #{tpu_custom_call.1}
  #allocation0 [shape = 'u32[]', space=smem, size = 0x4, offset = 0x4, fixed_abs, tag = 'smem constant byte address 0x4 - core index']
  #allocation1 [shape = 'u32[72,128]{1,0:T(1,128)}', space=vmem, size = 0x9000, scoped, tag = 'internal scratch']
  #allocation2 [shape = 'f32[8,32]{1,0:T(8,128)}', space=vmem, size = 0x1000, scoped, tag = 'scratch operand']
  %s0 = inlined_call_operand.hbm [shape: f32[8,16], index: 0, kind: input, shape index: {}]
  %s1 = inlined_call_operand.hbm [shape: f32[16,32], index: 1, kind: input, shape index: {}]
  %s2 = inlined_call_operand.vmem [shape: f32[1,32], index: 2, kind: input, shape index: {}]
  %s3 = inlined_call_operand.hbm [shape: bf16[8,16,32], index: 3, kind: input, shape index: {}]
  %s4 = inlined_call_operand.hbm [shape: f32[8,32], index: 4, kind: input, shape index: {}]
  %s5 = inlined_call_operand.hbm [shape: f32[8,32], index: 5, kind: output, shape index: {}]
  %s6 = sld [smem:[#allocation0]]
  $region54: #{tpu_custom_call.1} parent=0
    _
  %s8 = ssub.s32 1, %s6
  %s9 = scalar_select 0, %s8, %s6
  $region1: #{tpu_custom_call.1} parent=0
    #allocation3 [shape = 'u8[4096]{0}', space=vmem, size = 0x1000, scoped, tag = 'input window, operand 0, single buffered']
    #allocation4 [shape = 's32[1]{0}', space=sflag, size = 0x4, scoped, tag = 'scoped memory for tpu_custom_call.1']
    #allocation5 [shape = 's32[1]{0}', space=sflag, size = 0x4, scoped, tag = 'scoped memory for tpu_custom_call.1']
    #allocation6 [shape = 'u8[8192]{0}', space=vmem, size = 0x2000, scoped, tag = 'input window, operand 1, single buffered']
    #allocation7 [shape = 's32[1]{0}', space=sflag, size = 0x4, scoped, tag = 'scoped memory for tpu_custom_call.1']
    #allocation8 [shape = 'u8[32768]{0}', space=vmem, size = 0x8000, scoped, tag = 'input window, operand 3, single buffered']
    #allocation9 [shape = 'u8[4096]{0}', space=vmem, size = 0x1000, scoped, tag = 'input window, operand 4, single buffered']
    #allocation10 [shape = 's32[1]{0}', space=sflag, size = 0x4, scoped, tag = 'scoped memory for tpu_custom_call.1']
    #allocation11 [shape = 'u8[4096]{0}', space=vmem, size = 0x1000, scoped, tag = 'output window, operand 0, single buffered']
    %10 = vsyncpa [#allocation4], 0
    %11 = vsyncpa [#allocation7], 0
    %12 = vsyncpa [#allocation10], 0
    %13 = vsyncpa [#allocation5], 0
    // Predicated region
    $region2: #{tpu_custom_call.1} parent=1 // pred_check
      _
    $region3: #{tpu_custom_call.1} parent=1 // pred_check_branch
      %15 = sbr.rel (0) target = $region5
    $region4: #{tpu_custom_call.1} parent=1 // pred_region
      %17 = vsyncadd [#allocation4], 0
      %s19 = sshll.u32 %s0, 4
      %s20 = int_to_ptr.hbm [resolvable:$true] %s19
      %s21 = sshll.u32 [#allocation3], 4
      %s22 = int_to_ptr.vmem [resolvable:$true] %s21
      %24 = dma.hbm_to_vmem [thread:$0]  %s20, 128, %s22, [#allocation4]
    $region5: #{tpu_custom_call.1} parent=1 // pred_fallthru
      _
    // Predicated region
    $region6: #{tpu_custom_call.1} parent=1 // pred_check
      _
    $region7: #{tpu_custom_call.1} parent=1 // pred_check_branch
      %26 = sbr.rel (0) target = $region9
    $region8: #{tpu_custom_call.1} parent=1 // pred_region
      %28 = vsyncadd [#allocation7], 0
      %s29 = sshll.u32 %s1, 4
      %s30 = int_to_ptr.hbm [resolvable:$true] %s29
      %s31 = sshll.u32 [#allocation6], 4
      %s32 = int_to_ptr.vmem [resolvable:$true] %s31
      %37 = dma.hbm_to_vmem [thread:$0]  %s30, 256, %s32, [#allocation7], 128, 128, 8
    $region9: #{tpu_custom_call.1} parent=1 // pred_fallthru
      _
    // Predicated region
    $region10: #{tpu_custom_call.1} parent=1 // pred_check
      _
    $region11: #{tpu_custom_call.1} parent=1 // pred_check_branch
      %39 = sbr.rel (0) target = $region13
    $region12: #{tpu_custom_call.1} parent=1 // pred_region
      _
    $region13: #{tpu_custom_call.1} parent=1 // pred_fallthru
      _
    // Predicated region
    $region14: #{tpu_custom_call.1} parent=1 // pred_check
      _
    $region15: #{tpu_custom_call.1} parent=1 // pred_check_branch
      %41 = sbr.rel (0) target = $region17
    $region16: #{tpu_custom_call.1} parent=1 // pred_region
      %43 = vsyncadd [#allocation7], 0
      %s44 = sshll.u32 %s3, 4
      %s45 = int_to_ptr.hbm [resolvable:$true] %s44
      %s46 = sshll.u32 [#allocation8], 4
      %s47 = int_to_ptr.vmem [resolvable:$true] %s46
      %52 = dma.hbm_to_vmem [thread:$0]  %s45, 1024, %s47, [#allocation7], 64, 64, 4
    $region17: #{tpu_custom_call.1} parent=1 // pred_fallthru
      _
    // Predicated region
    $region18: #{tpu_custom_call.1} parent=1 // pred_check
      _
    $region19: #{tpu_custom_call.1} parent=1 // pred_check_branch
      %54 = sbr.rel (0) target = $region21
    $region20: #{tpu_custom_call.1} parent=1 // pred_region
      %56 = vsyncadd [#allocation10], 0
      %s58 = sshll.u32 %s4, 4
      %s59 = int_to_ptr.hbm [resolvable:$true] %s58
      %s60 = sshll.u32 [#allocation9], 4
      %s61 = int_to_ptr.vmem [resolvable:$true] %s60
      %63 = dma.hbm_to_vmem [thread:$0]  %s59, 128, %s61, [#allocation10]
    $region21: #{tpu_custom_call.1} parent=1 // pred_fallthru
      _
    // Predicated region
    $region22: #{tpu_custom_call.1} parent=1 // pred_check
      _
    $region23: #{tpu_custom_call.1} parent=1 // pred_check_branch
      %65 = sbr.rel (0) target = $region25
    $region24: #{tpu_custom_call.1} parent=1 // pred_region
      %67 = dma.done [#allocation4], 128
    $region25: #{tpu_custom_call.1} parent=1 // pred_fallthru
      _
    // Predicated region
    $region26: #{tpu_custom_call.1} parent=1 // pred_check
      _
    $region27: #{tpu_custom_call.1} parent=1 // pred_check_branch
      %69 = sbr.rel (0) target = $region29
    $region28: #{tpu_custom_call.1} parent=1 // pred_region
      %71 = dma.done [#allocation7], 256
    $region29: #{tpu_custom_call.1} parent=1 // pred_fallthru
      _
    // Predicated region
    $region30: #{tpu_custom_call.1} parent=1 // pred_check
      _
    $region31: #{tpu_custom_call.1} parent=1 // pred_check_branch
      %73 = sbr.rel (0) target = $region33
    $region32: #{tpu_custom_call.1} parent=1 // pred_region
      %75 = dma.done [#allocation7], 1024
    $region33: #{tpu_custom_call.1} parent=1 // pred_fallthru
      _
    // Predicated region
    $region34: #{tpu_custom_call.1} parent=1 // pred_check
      _
    $region35: #{tpu_custom_call.1} parent=1 // pred_check_branch
      %77 = sbr.rel (0) target = $region37
    $region36: #{tpu_custom_call.1} parent=1 // pred_region
      %79 = dma.done [#allocation10], 128
    $region37: #{tpu_custom_call.1} parent=1 // pred_fallthru
      _
    %p80 = scmp.eq.s32.totalorder 0, 0
    // Predicated region
    $region38: #{tpu_custom_call.1} parent=1 // pred_check
      %p81 = pneg %p80
    $region39: #{tpu_custom_call.1} parent=1 // pred_check_branch
      %83 = sbr.rel (%p81) target = $region41
    $region40: #{tpu_custom_call.1} parent=1 // pred_region
      %vm84 = vcmask 261120
      %85 = vst.msk [vmem:[#allocation2] sm:$0xff] %vm84, 0.0
    $region41: #{tpu_custom_call.1} parent=1 // pred_fallthru
      _
    %v86 = vld [vmem:[#allocation3] sm:$0xff]
    %v87 = vld [vmem:[#allocation6] sm:$0xff]
    %v88 = vld [vmem:[#allocation6 + $0x8] sm:$0xff]
    %v89 = vld [vmem:[#allocation8] sm:$0xf]
    %v90 = vld [vmem:[#allocation8 + $0x8] sm:$0xf]
    %v91 = vld [vmem:[#allocation8 + $0x10] sm:$0xf]
    %v92 = vld [vmem:[#allocation8 + $0x18] sm:$0xf]
    %v93 = vld [vmem:[#allocation8 + $0x20] sm:$0xf]
    %v94 = vld [vmem:[#allocation8 + $0x28] sm:$0xf]
    %v95 = vld [vmem:[#allocation8 + $0x30] sm:$0xf]
    %v96 = vld [vmem:[#allocation8 + $0x38] sm:$0xf]
    %v97 = vunpack.c.l.bf16 %v89
    %v98 = vunpack.c.l.bf16 %v90
    %v99 = vunpack.c.l.bf16 %v91
    %v100 = vunpack.c.l.bf16 %v92
    %v101 = vunpack.c.l.bf16 %v93
    %v102 = vunpack.c.l.bf16 %v94
    %v103 = vunpack.c.l.bf16 %v95
    %v104 = vunpack.c.l.bf16 %v96
    %v105 = vperm.slane %v86, 0
    %v106 = vlaneseq
    %v107 = vshrl.u32 %v106, 7
    %109 = vset.pattern.permute.xlu0 %v107
    %110 = vperm.xlu0 %109, %v105
    %v111 = vpop.permute.xlu0 %110
    %v112 = vperm.slane %v86, 1
    %v113 = vlaneseq
    %v114 = vshrl.u32 %v113, 7
    %116 = vset.pattern.permute.xlu0 %v114
    %117 = vperm.xlu0 %116, %v112
    %v118 = vpop.permute.xlu0 %117
    %v119 = vperm.slane %v86, 2
    %v120 = vlaneseq
    %v121 = vshrl.u32 %v120, 7
    %123 = vset.pattern.permute.xlu0 %v121
    %124 = vperm.xlu0 %123, %v119
    %v125 = vpop.permute.xlu0 %124
    %v126 = vperm.slane %v86, 3
    %v127 = vlaneseq
    %v128 = vshrl.u32 %v127, 7
    %130 = vset.pattern.permute.xlu0 %v128
    %131 = vperm.xlu0 %130, %v126
    %v132 = vpop.permute.xlu0 %131
    %v133 = vperm.slane %v86, 4
    %v134 = vlaneseq
    %v135 = vshrl.u32 %v134, 7
    %137 = vset.pattern.permute.xlu0 %v135
    %138 = vperm.xlu0 %137, %v133
    %v139 = vpop.permute.xlu0 %138
    %v140 = vperm.slane %v86, 5
    %v141 = vlaneseq
    %v142 = vshrl.u32 %v141, 7
    %144 = vset.pattern.permute.xlu0 %v142
    %145 = vperm.xlu0 %144, %v140
    %v146 = vpop.permute.xlu0 %145
    %v147 = vperm.slane %v86, 6
    %v148 = vlaneseq
    %v149 = vshrl.u32 %v148, 7
    %151 = vset.pattern.permute.xlu0 %v149
    %152 = vperm.xlu0 %151, %v147
    %v153 = vpop.permute.xlu0 %152
    %v154 = vperm.slane %v86, 7
    %v155 = vlaneseq
    %v156 = vshrl.u32 %v155, 7
    %158 = vset.pattern.permute.xlu0 %v156
    %159 = vperm.xlu0 %158, %v154
    %v160 = vpop.permute.xlu0 %159
    %v161 = vmul.f32 %v111, %v97
    %v162 = vmul.f32 %v118, %v98
    %v163 = vmul.f32 %v125, %v99
    %v164 = vmul.f32 %v132, %v100
    %v165 = vmul.f32 %v139, %v101
    %v166 = vmul.f32 %v146, %v102
    %v167 = vmul.f32 %v153, %v103
    %v168 = vmul.f32 %v160, %v104
    %vm169 = vcmask 261120
    %v170 = vsel %vm169, %v161, 0.0
    %v171 = vrot.slane %v170, 4
    %v172 = vadd.f32 %v170, %v171
    %v173 = vrot.slane %v172, 2
    %v174 = vadd.f32 %v172, %v173
    %v175 = vrot.slane %v174, 1
    %v176 = vadd.f32 %v174, %v175
    %v177 = vsel %vm169, %v162, 0.0
    %v178 = vrot.slane %v177, 4
    %v179 = vadd.f32 %v177, %v178
    %v180 = vrot.slane %v179, 2
    %v181 = vadd.f32 %v179, %v180
    %v182 = vrot.slane %v181, 1
    %v183 = vadd.f32 %v181, %v182
    %v184 = vsel %vm169, %v163, 0.0
    %v185 = vrot.slane %v184, 4
    %v186 = vadd.f32 %v184, %v185
    %v187 = vrot.slane %v186, 2
    %v188 = vadd.f32 %v186, %v187
    %v189 = vrot.slane %v188, 1
    %v190 = vadd.f32 %v188, %v189
    %v191 = vsel %vm169, %v164, 0.0
    %v192 = vrot.slane %v191, 4
    %v193 = vadd.f32 %v191, %v192
    %v194 = vrot.slane %v193, 2
    %v195 = vadd.f32 %v193, %v194
    %v196 = vrot.slane %v195, 1
    %v197 = vadd.f32 %v195, %v196
    %v198 = vsel %vm169, %v165, 0.0
    %v199 = vrot.slane %v198, 4
    %v200 = vadd.f32 %v198, %v199
    %v201 = vrot.slane %v200, 2
    %v202 = vadd.f32 %v200, %v201
    %v203 = vrot.slane %v202, 1
    %v204 = vadd.f32 %v202, %v203
    %v205 = vsel %vm169, %v166, 0.0
    %v206 = vrot.slane %v205, 4
    %v207 = vadd.f32 %v205, %v206
    %v208 = vrot.slane %v207, 2
    %v209 = vadd.f32 %v207, %v208
    %v210 = vrot.slane %v209, 1
    %v211 = vadd.f32 %v209, %v210
    %v212 = vsel %vm169, %v167, 0.0
    %v213 = vrot.slane %v212, 4
    %v214 = vadd.f32 %v212, %v213
    %v215 = vrot.slane %v214, 2
    %v216 = vadd.f32 %v214, %v215
    %v217 = vrot.slane %v216, 1
    %v218 = vadd.f32 %v216, %v217
    %v219 = vsel %vm169, %v168, 0.0
    %v220 = vrot.slane %v219, 4
    %v221 = vadd.f32 %v219, %v220
    %v222 = vrot.slane %v221, 2
    %v223 = vadd.f32 %v221, %v222
    %v224 = vrot.slane %v223, 1
    %v225 = vadd.f32 %v223, %v224
    %v226 = vadd.f32 %v176, 0.0
    %v227 = vadd.f32 %v183, 0.0
    %v228 = vadd.f32 %v190, 0.0
    %v229 = vadd.f32 %v197, 0.0
    %v230 = vadd.f32 %v204, 0.0
    %v231 = vadd.f32 %v211, 0.0
    %v232 = vadd.f32 %v218, 0.0
    %v233 = vadd.f32 %v225, 0.0
    %v234 = vld [vmem:[#allocation8 + $0x4] sm:$0xf]
    %v235 = vld [vmem:[#allocation8 + $0xc] sm:$0xf]
    %v236 = vld [vmem:[#allocation8 + $0x14] sm:$0xf]
    %v237 = vld [vmem:[#allocation8 + $0x1c] sm:$0xf]
    %v238 = vld [vmem:[#allocation8 + $0x24] sm:$0xf]
    %v239 = vld [vmem:[#allocation8 + $0x2c] sm:$0xf]
    %v240 = vld [vmem:[#allocation8 + $0x34] sm:$0xf]
    %v241 = vld [vmem:[#allocation8 + $0x3c] sm:$0xf]
    %v242 = vunpack.c.l.bf16 %v234
    %v243 = vunpack.c.l.bf16 %v235
    %v244 = vunpack.c.l.bf16 %v236
    %v245 = vunpack.c.l.bf16 %v237
    %v246 = vunpack.c.l.bf16 %v238
    %v247 = vunpack.c.l.bf16 %v239
    %v248 = vunpack.c.l.bf16 %v240
    %v249 = vunpack.c.l.bf16 %v241
    %v250 = vlaneseq
    %v251 = vshrl.u32 %v250, 7
    %v252 = vadd.s32 %v251, 8
    %253 = vset.pattern.permute.xlu0 %v252
    %254 = vperm.xlu0 %253, %v105
    %v255 = vpop.permute.xlu0 %254
    %v256 = vlaneseq
    %v257 = vshrl.u32 %v256, 7
    %v258 = vadd.s32 %v257, 8
    %259 = vset.pattern.permute.xlu0 %v258
    %260 = vperm.xlu0 %259, %v112
    %v261 = vpop.permute.xlu0 %260
    %v262 = vlaneseq
    %v263 = vshrl.u32 %v262, 7
    %v264 = vadd.s32 %v263, 8
    %265 = vset.pattern.permute.xlu0 %v264
    %266 = vperm.xlu0 %265, %v119
    %v267 = vpop.permute.xlu0 %266
    %v268 = vlaneseq
    %v269 = vshrl.u32 %v268, 7
    %v270 = vadd.s32 %v269, 8
    %271 = vset.pattern.permute.xlu0 %v270
    %272 = vperm.xlu0 %271, %v126
    %v273 = vpop.permute.xlu0 %272
    %v274 = vlaneseq
    %v275 = vshrl.u32 %v274, 7
    %v276 = vadd.s32 %v275, 8
    %277 = vset.pattern.permute.xlu0 %v276
    %278 = vperm.xlu0 %277, %v133
    %v279 = vpop.permute.xlu0 %278
    %v280 = vlaneseq
    %v281 = vshrl.u32 %v280, 7
    %v282 = vadd.s32 %v281, 8
    %283 = vset.pattern.permute.xlu0 %v282
    %284 = vperm.xlu0 %283, %v140
    %v285 = vpop.permute.xlu0 %284
    %v286 = vlaneseq
    %v287 = vshrl.u32 %v286, 7
    %v288 = vadd.s32 %v287, 8
    %289 = vset.pattern.permute.xlu0 %v288
    %290 = vperm.xlu0 %289, %v147
    %v291 = vpop.permute.xlu0 %290
    %v292 = vlaneseq
    %v293 = vshrl.u32 %v292, 7
    %v294 = vadd.s32 %v293, 8
    %295 = vset.pattern.permute.xlu0 %v294
    %296 = vperm.xlu0 %295, %v154
    %v297 = vpop.permute.xlu0 %296
    %v298 = vmul.f32 %v255, %v242
    %v299 = vmul.f32 %v261, %v243
    %v300 = vmul.f32 %v267, %v244
    %v301 = vmul.f32 %v273, %v245
    %v302 = vmul.f32 %v279, %v246
    %v303 = vmul.f32 %v285, %v247
    %v304 = vmul.f32 %v291, %v248
    %v305 = vmul.f32 %v297, %v249
    %v306 = vsel %vm169, %v298, 0.0
    %v307 = vrot.slane %v306, 4
    %v308 = vadd.f32 %v306, %v307
    %v309 = vrot.slane %v308, 2
    %v310 = vadd.f32 %v308, %v309
    %v311 = vrot.slane %v310, 1
    %v312 = vadd.f32 %v310, %v311
    %v313 = vsel %vm169, %v299, 0.0
    %v314 = vrot.slane %v313, 4
    %v315 = vadd.f32 %v313, %v314
    %v316 = vrot.slane %v315, 2
    %v317 = vadd.f32 %v315, %v316
    %v318 = vrot.slane %v317, 1
    %v319 = vadd.f32 %v317, %v318
    %v320 = vsel %vm169, %v300, 0.0
    %v321 = vrot.slane %v320, 4
    %v322 = vadd.f32 %v320, %v321
    %v323 = vrot.slane %v322, 2
    %v324 = vadd.f32 %v322, %v323
    %v325 = vrot.slane %v324, 1
    %v326 = vadd.f32 %v324, %v325
    %v327 = vsel %vm169, %v301, 0.0
    %v328 = vrot.slane %v327, 4
    %v329 = vadd.f32 %v327, %v328
    %v330 = vrot.slane %v329, 2
    %v331 = vadd.f32 %v329, %v330
    %v332 = vrot.slane %v331, 1
    %v333 = vadd.f32 %v331, %v332
    %v334 = vsel %vm169, %v302, 0.0
    %v335 = vrot.slane %v334, 4
    %v336 = vadd.f32 %v334, %v335
    %v337 = vrot.slane %v336, 2
    %v338 = vadd.f32 %v336, %v337
    %v339 = vrot.slane %v338, 1
    %v340 = vadd.f32 %v338, %v339
    %v341 = vsel %vm169, %v303, 0.0
    %v342 = vrot.slane %v341, 4
    %v343 = vadd.f32 %v341, %v342
    %v344 = vrot.slane %v343, 2
    %v345 = vadd.f32 %v343, %v344
    %v346 = vrot.slane %v345, 1
    %v347 = vadd.f32 %v345, %v346
    %v348 = vsel %vm169, %v304, 0.0
    %v349 = vrot.slane %v348, 4
    %v350 = vadd.f32 %v348, %v349
    %v351 = vrot.slane %v350, 2
    %v352 = vadd.f32 %v350, %v351
    %v353 = vrot.slane %v352, 1
    %v354 = vadd.f32 %v352, %v353
    %v355 = vsel %vm169, %v305, 0.0
    %v356 = vrot.slane %v355, 4
    %v357 = vadd.f32 %v355, %v356
    %v358 = vrot.slane %v357, 2
    %v359 = vadd.f32 %v357, %v358
    %v360 = vrot.slane %v359, 1
    %v361 = vadd.f32 %v359, %v360
    %v362 = vadd.f32 %v226, %v312
    %v363 = vadd.f32 %v227, %v319
    %v364 = vadd.f32 %v228, %v326
    %v365 = vadd.f32 %v229, %v333
    %v366 = vadd.f32 %v230, %v340
    %v367 = vadd.f32 %v231, %v347
    %v368 = vadd.f32 %v232, %v354
    %v369 = vadd.f32 %v233, %v361
    %v370 = vld [vmem:[#allocation2] sm:$0xff]
    %vm379 = vcmask 1041409
    %v380 = vsel %vm379, %v363, %v362
    %vm381 = vcmask 1042434
    %v382 = vsel %vm381, %v364, %v380
    %vm383 = vcmask 1043459
    %v384 = vsel %vm383, %v365, %v382
    %vm385 = vcmask 1044484
    %v386 = vsel %vm385, %v366, %v384
    %vm387 = vcmask 1045509
    %v388 = vsel %vm387, %v367, %v386
    %vm389 = vcmask 1046534
    %v390 = vsel %vm389, %v368, %v388
    %vm391 = vcmask 1047559
    %v392 = vsel %vm391, %v369, %v390
    %vm394 = vcmask 130048
    %v396 = vsel %vm394, %v86, 0
    %398 = vmatpush.msra.mxu0 0.0
    %399 = vmatpush.msra.mxu0 0.0
    %400 = vmatpush.msra.mxu0 0.0
    %401 = vmatpush.msra.mxu0 0.0
    %402 = vmatpush.msra.mxu0 0.0
    %403 = vmatpush.msra.mxu0 0.0
    %404 = vmatpush.msra.mxu0 0.0
    %405 = vmatpush.msra.mxu0 0.0
    %406 = vmatpush.msra.mxu0 0.0
    %407 = vmatpush.msra.mxu0 0.0
    %408 = vmatpush.msra.mxu0 0.0
    %409 = vmatpush.msra.mxu0 0.0
    %410 = vmatpush.msra.mxu0 0.0
    %411 = vmatpush.msra.mxu0 0.0
    %412 = vmatpush.msra.mxu0 %v88
    %413 = vmatpush.msra.mxu0 %v87
    %414 = vmatmul.f32.gmra.mxu0 %v396
    %v415 = vpop.f32.mrf.mxu0
    %v416 = vadd.f32 %v392, %v415
    %417 = vdwg.mxu0
    %v418 = vadd.f32 %v370, %v416
    %419 = vst.msk [vmem:[#allocation2] sm:$0xff] %vm169, %v418
    // Predicated region
    $region42: #{tpu_custom_call.1} parent=1 // pred_check
      %p420 = pneg %p80
    $region43: #{tpu_custom_call.1} parent=1 // pred_check_branch
      %422 = sbr.rel (%p420) target = $region45
    $region44: #{tpu_custom_call.1} parent=1 // pred_region
      %v423 = vld [vmem:[#allocation2] sm:$0xff]
      %v424 = vld [vmem:[%s2] sm:$0x1]
      %v426 = vperm.slane %v424, 0
      %v428 = vadd.f32 %v423, %v426
      %v429 = vld [vmem:[#allocation9] sm:$0xff]
      %v430 = vadd.f32 %v428, %v429
      %v431 = vmax.f32 %v430, 0.0
      %432 = vst.msk [vmem:[#allocation11] sm:$0xff] %vm169, %v431
    $region45: #{tpu_custom_call.1} parent=1 // pred_fallthru
      _
    // Predicated region
    $region46: #{tpu_custom_call.1} parent=1 // pred_check
      _
    $region47: #{tpu_custom_call.1} parent=1 // pred_check_branch
      %434 = sbr.rel (0) target = $region49
    $region48: #{tpu_custom_call.1} parent=1 // pred_region
      %436 = vsyncadd [#allocation5], 0
      %s438 = sshll.u32 [#allocation11], 4
      %s439 = int_to_ptr.vmem [resolvable:$true] %s438
      %s440 = sshll.u32 %s5, 4
      %s441 = int_to_ptr.hbm [resolvable:$true] %s440
      %443 = dma.vmem_to_hbm [thread:$0]  %s439, 128, %s441, [#allocation5]
    $region49: #{tpu_custom_call.1} parent=1 // pred_fallthru
      _
    // Predicated region
    $region50: #{tpu_custom_call.1} parent=1 // pred_check
      _
    $region51: #{tpu_custom_call.1} parent=1 // pred_check_branch
      %445 = sbr.rel (0) target = $region53
    $region52: #{tpu_custom_call.1} parent=1 // pred_region
      %447 = dma.done [#allocation5], 128
    $region53: #{tpu_custom_call.1} parent=1 // pred_fallthru
      _
    %448 = vsyncpa [#allocation4], 1
    %449 = vsyncpa [#allocation7], 1
    %450 = vsyncpa [#allocation10], 1
    %451 = vsyncpa [#allocation5], 1

</llo_original>
